<compile_context>
chip_gen: v7x
topology: tpu7x:2x2x1
jax: 0.10.0
libtpu: 0.0.40
codegen_flags: <defaults>
</compile_context>

<pallas_src>
import math
import functools
import jax
import jax.numpy as jnp
from jax import lax
from jax.experimental import pallas as pl
from jax.experimental.pallas import tpu as pltpu


# ----------------------------------------------------------------------------
# Generation-aware VMEM limit
# ----------------------------------------------------------------------------
@functools.lru_cache(maxsize=None)
def _vmem_limit_bytes():
    limit = 64 * 1024 * 1024                       # safe default, every gen
    try:
        cap = int(pltpu.get_tpu_info().vmem_capacity_bytes)
        # Leave ~16 MiB headroom for compiler scratch; cap at 110 MiB on the
        # 128-MiB parts (v5e/v6e).  v7x (64 MiB physical) ends up at 48 MiB.
        limit = max(32 * 1024 * 1024,
                    min(cap - 16 * 1024 * 1024, 110 * 1024 * 1024))
    except Exception:
        pass
    return limit


def _round_up(x, m):
    return ((x + m - 1) // m) * m


def _tile_and_pad(dim, cap, align):
    """Return (tile, padded_dim). Either the block is the full dim (always a
    legal block) or it is a multiple of `align` dividing the padded dim."""
    if dim <= cap:
        return dim, dim
    padded = _round_up(dim, align)
    tile = align
    for t in range(cap, align - 1, -align):
        if padded % t == 0:
            tile = t
            break
    return tile, padded


def _choose_time_chunk(seq, cap=8):
    for t in range(min(cap, seq), 0, -1):
        if seq % t == 0:
            return t
    return 1


# ----------------------------------------------------------------------------
# Pallas kernels
# ----------------------------------------------------------------------------
def matmul_bias_kernel(x_ref, w_ref, b_ref, o_ref, acc_ref):
    """Tiled (M,K)@(K,N) + bias.  grid = (M/tm, N/tn, K/tk), K innermost.
    Operands may be bf16; accumulation is f32."""
    @pl.when(pl.program_id(2) == 0)
    def _():
        acc_ref[...] = jnp.zeros_like(acc_ref)

    acc_ref[...] += jnp.dot(x_ref[...], w_ref[...],
                            preferred_element_type=jnp.float32)

    @pl.when(pl.program_id(2) == pl.num_programs(2) - 1)
    def _():
        o_ref[...] = (acc_ref[...] + b_ref[...]).astype(o_ref.dtype)


def lstm_recurrence_kernel(gx_ref, whh_ref, h0_ref, c0_ref,
                           hs_ref, cT_ref, h_sc, c_sc):
    """One LSTM layer over a time chunk with precomputed input gates.

    grid = (seq // Tc,)
    gx_ref  : (Tc, B, 4H)  x_t @ W_ih + (b_ih + b_hh), precomputed
    whh_ref : (H, 4H)      hidden-to-hidden weights (bf16, i,f,g,o concat)
    h0/c0   : (B, H)       initial state
    hs_ref  : (Tc, B, H)   per-timestep hidden output
    cT_ref  : (B, H)       final cell state, written only on the last chunk
    h_sc/c_sc: VMEM scratch carrying the recurrent state across chunks.
    """
    blk = pl.program_id(0)

    @pl.when(blk == 0)
    def _():
        h_sc[...] = h0_ref[...]
        c_sc[...] = c0_ref[...]

    H = h_sc.shape[-1]
    Tc = gx_ref.shape[0]
    whh = whh_ref[...]                              # (H, 4H) bf16

    def step(t, carry):
        h, c = carry
        gates = gx_ref[t] + jnp.dot(h.astype(whh.dtype), whh,
                                    preferred_element_type=jnp.float32)
        # NOTE: gate slices are lane-aligned (free vreg selects) when
        # H % 128 == 0 (true for the module's num_hiddens=256).
        i = jax.nn.sigmoid(gates[:, 0 * H:1 * H])
        f = jax.nn.sigmoid(gates[:, 1 * H:2 * H])
        g = jnp.tanh(gates[:, 2 * H:3 * H])
        o = jax.nn.sigmoid(gates[:, 3 * H:4 * H])
        c = f * c + i * g
        h = o * jnp.tanh(c)
        hs_ref[t] = h
        return (h, c)

    h, c = lax.fori_loop(0, Tc, step, (h_sc[...], c_sc[...]), unroll=True)
    h_sc[...] = h
    c_sc[...] = c

    @pl.when(blk == pl.num_programs(0) - 1)
    def _():
        cT_ref[...] = c


# ----------------------------------------------------------------------------
# Wrappers
# ----------------------------------------------------------------------------
def matmul_bias(x2d, w, b, *, tm=512, tn=512, tk=512):
    """out = x2d @ w + b (b shape (1, N)), bf16 operands, f32 accumulate."""
    M, K = x2d.shape
    K2, N = w.shape
    assert K == K2
    tm, Mp = _tile_and_pad(M, tm, 16)
    tk, Kp = _tile_and_pad(K, tk, 128)
    tn, Np = _tile_and_pad(N, tn, 128)

    x2d = x2d.astype(jnp.bfloat16)
    w = w.astype(jnp.bfloat16)
    b = b.astype(jnp.float32)
    if (Mp, Kp) != (M, K):
        x2d = jnp.pad(x2d, ((0, Mp - M), (0, Kp - K)))
    if (Kp, Np) != (K, N):
        w = jnp.pad(w, ((0, Kp - K), (0, Np - N)))
    if Np != N:
        b = jnp.pad(b, ((0, 0), (0, Np - N)))

    grid = (Mp // tm, Np // tn, Kp // tk)
    out = pl.pallas_call(
        matmul_bias_kernel,
        out_shape=jax.ShapeDtypeStruct((Mp, Np), jnp.float32),
        grid_spec=pltpu.PrefetchScalarGridSpec(
            num_scalar_prefetch=0,
            grid=grid,
            in_specs=[
                pl.BlockSpec((tm, tk), lambda i, j, k: (i, k)),
                pl.BlockSpec((tk, tn), lambda i, j, k: (k, j)),
                pl.BlockSpec((1, tn), lambda i, j, k: (0, j)),
            ],
            out_specs=pl.BlockSpec((tm, tn), lambda i, j, k: (i, j)),
            scratch_shapes=[pltpu.VMEM((tm, tn), jnp.float32)]),
        compiler_params=pltpu.CompilerParams(
            dimension_semantics=("parallel", "parallel", "arbitrary"),
            vmem_limit_bytes=_vmem_limit_bytes()),
    )(x2d, w, b)
    if (Mp, Np) != (M, N):
        out = out[:M, :N]
    return out


def lstm_recurrence(gx, whh_bf16, h0, c0, *, time_chunk=8):
    """Serial time loop (chunked): h @ W_hh + gate elementwise per step."""
    seq, batch, four_h = gx.shape
    H = whh_bf16.shape[0]
    Tc = _choose_time_chunk(seq, time_chunk)

    whh_kwargs = {}
    if whh_bf16.size * whh_bf16.dtype.itemsize > (8 << 20):
        # Constant-index weight block: single-buffer so large H fits v7x VMEM.
        whh_kwargs = dict(pipeline_mode=pl.Buffered(1))

    hs, c_last = pl.pallas_call(
        lstm_recurrence_kernel,
        out_shape=(jax.ShapeDtypeStruct((seq, batch, H), jnp.float32),
                   jax.ShapeDtypeStruct((batch, H), jnp.float32)),
        grid_spec=pltpu.PrefetchScalarGridSpec(
            num_scalar_prefetch=0,
            grid=(seq // Tc,),
            in_specs=[
                pl.BlockSpec((Tc, batch, four_h), lambda t: (t, 0, 0)),
                pl.BlockSpec((H, four_h), lambda t: (0, 0), **whh_kwargs),
                pl.BlockSpec((batch, H), lambda t: (0, 0)),
                pl.BlockSpec((batch, H), lambda t: (0, 0)),
            ],
            out_specs=[
                pl.BlockSpec((Tc, batch, H), lambda t: (t, 0, 0)),
                pl.BlockSpec((batch, H), lambda t: (0, 0)),
            ],
            scratch_shapes=[pltpu.VMEM((batch, H), jnp.float32),
                            pltpu.VMEM((batch, H), jnp.float32)]),
        compiler_params=pltpu.CompilerParams(
            dimension_semantics=("arbitrary",),
            vmem_limit_bytes=_vmem_limit_bytes()),
    )(gx, whh_bf16, h0, c0)
    return hs, c_last


def my_lstm_forward(X, state, params, vocab_size):
    """Equivalent of My_LSTM.forward (inference; dropout=0)."""
    h0, c0 = state                                    # (L, B, H)
    batch, seq = X.shape
    H = h0.shape[-1]

    # Pad batch up to a sublane multiple (8); padded rows sliced off at end.
    b_pad = ((batch + 7) // 8) * 8
    pad = b_pad - batch
    tokens = X.T                                      # (S, B) time-major
    if pad:
        tokens = jnp.pad(tokens, ((0, 0), (0, pad)))
        h0 = jnp.pad(h0, ((0, 0), (0, pad), (0, 0)))
        c0 = jnp.pad(c0, ((0, 0), (0, pad), (0, 0)))

    hT, cT = [], []
    inp = None
    for l, (wih, whh, b) in enumerate(params["layers"]):
        if l == 0:
            # one_hot(tokens) @ W_ih + b == W_ih[tokens] + b (row gather; no
            # (S,B,V) one-hot tensor, no 1/V-sparse matmul).  Kept f32.
            gx = jnp.take(wih, tokens, axis=0) + b    # (S, B_pad, 4H)
        else:
            gx = matmul_bias(inp.reshape(seq * b_pad, H), wih, b)
            gx = gx.reshape(seq, b_pad, 4 * H)
        hs, c_last = lstm_recurrence(gx, whh.astype(jnp.bfloat16),
                                     h0[l], c0[l])
        hT.append(hs[-1])            # final hidden state == last hs step
        cT.append(c_last)
        inp = hs                                      # (S, B_pad, H)
    # TODO(synk): inter-layer dropout (train mode) and the v7x layer-wavefront
    # two-TensorCore fusion are not implemented (inference, serial layers).

    out2d = matmul_bias(inp.reshape(seq * b_pad, H),
                        params["w_out"], params["b_out"])
    out = out2d.reshape(seq, b_pad, vocab_size)[:, :batch]
    hN = jnp.stack(hT)[:, :batch]
    cN = jnp.stack(cT)[:, :batch]
    return out, (hN, cN)


# ----------------------------------------------------------------------------
# Pure-JAX f32 reference (for correctness check)
# ----------------------------------------------------------------------------
def reference_forward(X, state, params, vocab_size):
    h0, c0 = state
    x = jax.nn.one_hot(X.T, vocab_size, dtype=jnp.float32)
    inp = x
    hT, cT = [], []
    for l, (wih, whh, b) in enumerate(params["layers"]):
        H = whh.shape[0]

        def step(carry, x_t):
            h, c = carry
            gates = x_t @ wih + h @ whh + b[0]
            i = jax.nn.sigmoid(gates[:, 0 * H:1 * H])
            f = jax.nn.sigmoid(gates[:, 1 * H:2 * H])
            g = jnp.tanh(gates[:, 2 * H:3 * H])
            o = jax.nn.sigmoid(gates[:, 3 * H:4 * H])
            c = f * c + i * g
            h = o * jnp.tanh(c)
            return (h, c), h

        (h_last, c_last), hs = lax.scan(step, (h0[l], c0[l]), inp)
        hT.append(h_last)
        cT.append(c_last)
        inp = hs
    out = inp @ params["w_out"] + params["b_out"][0]
    return out, (jnp.stack(hT), jnp.stack(cT))


# ----------------------------------------------------------------------------
# Deterministic parameter init (shapes follow nn.LSTM / nn.Linear)
# ----------------------------------------------------------------------------
def init_params(key, vocab_size, num_hiddens, num_layers):
    H = num_hiddens
    stdv = 1.0 / math.sqrt(H)
    layers = []
    for l in range(num_layers):
        in_dim = vocab_size if l == 0 else H
        key, k1, k2, k3, k4 = jax.random.split(key, 5)
        # PyTorch layout: weight_ih (4H, in), weight_hh (4H, H) -> transposed
        # so kernels do plain x @ W_ih and h @ W_hh matmuls.
        w_ih = jax.random.uniform(k1, (4 * H, in_dim), jnp.float32, -stdv, stdv)
        w_hh = jax.random.uniform(k2, (4 * H, H), jnp.float32, -stdv, stdv)
        b_ih = jax.random.uniform(k3, (4 * H,), jnp.float32, -stdv, stdv)
        b_hh = jax.random.uniform(k4, (4 * H,), jnp.float32, -stdv, stdv)
        layers.append((w_ih.T, w_hh.T, (b_ih + b_hh)[None, :]))
    key, k5, k6 = jax.random.split(key, 3)
    lin_std = 1.0 / math.sqrt(H)
    w_lin = jax.random.uniform(k5, (vocab_size, H), jnp.float32, -lin_std, lin_std)
    b_lin = jax.random.uniform(k6, (vocab_size,), jnp.float32, -lin_std, lin_std)
    return {"layers": layers, "w_out": w_lin.T, "b_out": b_lin[None, :]}


# ----------------------------------------------------------------------------
if __name__ == "__main__":
    vocab_size, num_hiddens, num_layers = 32, 32, 2
    batch, seq = 2, 8

    key = jax.random.PRNGKey(0)
    key, pk, xk = jax.random.split(key, 3)
    params = init_params(pk, vocab_size, num_hiddens, num_layers)

    # X: (batch, seq) integer tokens, as the PyTorch module expects.
    X = jax.random.randint(xk, (batch, seq), 0, vocab_size, dtype=jnp.int32)
    state = (jnp.zeros((num_layers, batch, num_hiddens), jnp.float32),
             jnp.zeros((num_layers, batch, num_hiddens), jnp.float32))

    out, (hN, cN) = my_lstm_forward(X, state, params, vocab_size)
    out = jax.block_until_ready(out)
    hN = jax.block_until_ready(hN)
    cN = jax.block_until_ready(cN)

    # Check against pure-JAX f32 reference.  Tolerance loosened (bf16 MXU
    # operands with f32 accumulation in the kernels).
    out_ref, (h_ref, c_ref) = reference_forward(X, state, params, vocab_size)
    assert out.shape == (seq, batch, vocab_size)
    assert hN.shape == (num_layers, batch, num_hiddens)
    assert cN.shape == (num_layers, batch, num_hiddens)
    assert jnp.allclose(out, out_ref, rtol=2e-2, atol=2e-2)
    assert jnp.allclose(hN, h_ref, rtol=2e-2, atol=2e-2)
    assert jnp.allclose(cN, c_ref, rtol=2e-2, atol=2e-2)

    print("KERNEL_OK")
</pallas_src>

<mosaic_0001>
module attributes {stable_mosaic.version = 11 : i64} {
  func.func @lstm_recurrence_kernel(%arg0: i32, %arg1: memref<8x8x128xf32, #tpu.memory_space<vmem>>, %arg2: memref<32x128xbf16, #tpu.memory_space<vmem>>, %arg3: memref<8x32xf32, #tpu.memory_space<vmem>>, %arg4: memref<8x32xf32, #tpu.memory_space<vmem>>, %arg5: memref<8x8x32xf32, #tpu.memory_space<vmem>>, %arg6: memref<8x32xf32, #tpu.memory_space<vmem>>, %arg7: memref<8x32xf32, #tpu.memory_space<vmem>>, %arg8: memref<8x32xf32, #tpu.memory_space<vmem>>) attributes {dimension_semantics = [#tpu.dimension_semantics<arbitrary>], iteration_bounds = array<i64: 1>, scalar_prefetch = 0 : i64, scratch_operands = 2 : i64, tpu.core_type = #tpu.core_type<tc>, window_params = [{transform_indices = @transform_0, window_bounds = array<i64: 8, 8, 128>}, {pipeline_mode = #tpu.pipeline_mode<synchronous>, transform_indices = @transform_1, window_bounds = array<i64: 32, 128>}, {pipeline_mode = #tpu.pipeline_mode<synchronous>, transform_indices = @transform_2, window_bounds = array<i64: 8, 32>}, {pipeline_mode = #tpu.pipeline_mode<synchronous>, transform_indices = @transform_3, window_bounds = array<i64: 8, 32>}, {transform_indices = @transform_4, window_bounds = array<i64: 8, 8, 32>}, {pipeline_mode = #tpu.pipeline_mode<synchronous>, transform_indices = @transform_5, window_bounds = array<i64: 8, 32>}]} {
    %c0_i32 = arith.constant 0 : i32
    %0 = arith.cmpi eq, %arg0, %c0_i32 : i32
    %1 = arith.extui %0 : i1 to i32
    %c0_i32_0 = arith.constant 0 : i32
    %2 = arith.cmpi ne, %1, %c0_i32_0 : i32
    scf.if %2 {
      %c0_76 = arith.constant 0 : index
      %c0_77 = arith.constant 0 : index
      %291 = vector.load %arg3[%c0_76, %c0_77] : memref<8x32xf32, #tpu.memory_space<vmem>>, vector<8x32xf32>
      %c0_78 = arith.constant 0 : index
      %c0_79 = arith.constant 0 : index
      %292 = vector.load %arg7[%c0_78, %c0_79] : memref<8x32xf32, #tpu.memory_space<vmem>>, vector<8x32xf32>
      tpu.vector_store %arg7[%c0_78, %c0_79], %291 {strides = array<i32>} : memref<8x32xf32, #tpu.memory_space<vmem>>, vector<8x32xf32>,
      %c0_80 = arith.constant 0 : index
      %c0_81 = arith.constant 0 : index
      %293 = vector.load %arg4[%c0_80, %c0_81] : memref<8x32xf32, #tpu.memory_space<vmem>>, vector<8x32xf32>
      %c0_82 = arith.constant 0 : index
      %c0_83 = arith.constant 0 : index
      %294 = vector.load %arg8[%c0_82, %c0_83] : memref<8x32xf32, #tpu.memory_space<vmem>>, vector<8x32xf32>
      tpu.vector_store %arg8[%c0_82, %c0_83], %293 {strides = array<i32>} : memref<8x32xf32, #tpu.memory_space<vmem>>, vector<8x32xf32>,
    } else {
    }
    %c0 = arith.constant 0 : index
    %c0_1 = arith.constant 0 : index
    %3 = vector.load %arg2[%c0, %c0_1] : memref<32x128xbf16, #tpu.memory_space<vmem>>, vector<32x128xbf16>
    %c0_2 = arith.constant 0 : index
    %c0_3 = arith.constant 0 : index
    %4 = vector.load %arg7[%c0_2, %c0_3] : memref<8x32xf32, #tpu.memory_space<vmem>>, vector<8x32xf32>
    %c0_4 = arith.constant 0 : index
    %c0_5 = arith.constant 0 : index
    %5 = vector.load %arg8[%c0_4, %c0_5] : memref<8x32xf32, #tpu.memory_space<vmem>>, vector<8x32xf32>
    %c0_i32_6 = arith.constant 0 : i32
    %6 = arith.index_cast %c0_i32_6 : i32 to index
    %c0_7 = arith.constant 0 : index
    %c0_8 = arith.constant 0 : index
    %7 = vector.load %arg1[%6, %c0_7, %c0_8] : memref<8x8x128xf32, #tpu.memory_space<vmem>>, vector<1x8x128xf32>
    %8 = vector.shape_cast %7 : vector<1x8x128xf32> to vector<8x128xf32>
    %9 = arith.truncf %4 : vector<8x32xf32> to vector<8x32xbf16>
    %cst = arith.constant dense<0.000000e+00> : vector<8x128xf32>
    %10 = tpu.matmul %9, %3, %cst {dimension_numbers = #tpu.dot_dimension_numbers<[1], [0], [0], [1], [0, 0, 1, 1], [], []>} : vector<8x32xbf16>, vector<32x128xbf16>, vector<8x128xf32> -> vector<8x128xf32>
    %11 = arith.addf %8, %10 : vector<8x128xf32>
    %12 = vector.extract_strided_slice %11 {offsets = [0, 0], sizes = [8, 32], strides = [1, 1]} : vector<8x128xf32> to vector<8x32xf32>
    %13 = arith.negf %12 : vector<8x32xf32>
    %14 = math.exp %13 : vector<8x32xf32>
    %cst_9 = arith.constant 1.000000e+00 : f32
    %15 = vector.broadcast %cst_9 : f32 to vector<8x32xf32>
    %16 = arith.addf %15, %14 : vector<8x32xf32>
    %17 = arith.divf %15, %16 : vector<8x32xf32>
    %18 = vector.extract_strided_slice %11 {offsets = [0, 32], sizes = [8, 32], strides = [1, 1]} : vector<8x128xf32> to vector<8x32xf32>
    %19 = arith.negf %18 : vector<8x32xf32>
    %20 = math.exp %19 : vector<8x32xf32>
    %cst_10 = arith.constant 1.000000e+00 : f32
    %21 = vector.broadcast %cst_10 : f32 to vector<8x32xf32>
    %22 = arith.addf %21, %20 : vector<8x32xf32>
    %23 = arith.divf %21, %22 : vector<8x32xf32>
    %24 = vector.extract_strided_slice %11 {offsets = [0, 64], sizes = [8, 32], strides = [1, 1]} : vector<8x128xf32> to vector<8x32xf32>
    %25 = math.tanh %24 : vector<8x32xf32>
    %26 = vector.extract_strided_slice %11 {offsets = [0, 96], sizes = [8, 32], strides = [1, 1]} : vector<8x128xf32> to vector<8x32xf32>
    %27 = arith.negf %26 : vector<8x32xf32>
    %28 = math.exp %27 : vector<8x32xf32>
    %cst_11 = arith.constant 1.000000e+00 : f32
    %29 = vector.broadcast %cst_11 : f32 to vector<8x32xf32>
    %30 = arith.addf %29, %28 : vector<8x32xf32>
    %31 = arith.divf %29, %30 : vector<8x32xf32>
    %32 = arith.mulf %23, %5 : vector<8x32xf32>
    %33 = arith.mulf %17, %25 : vector<8x32xf32>
    %34 = arith.addf %32, %33 : vector<8x32xf32>
    %35 = math.tanh %34 : vector<8x32xf32>
    %36 = arith.mulf %31, %35 : vector<8x32xf32>
    %37 = arith.index_cast %c0_i32_6 : i32 to index
    %c0_12 = arith.constant 0 : index
    %c0_13 = arith.constant 0 : index
    %38 = vector.load %arg5[%37, %c0_12, %c0_13] : memref<8x8x32xf32, #tpu.memory_space<vmem>>, vector<1x8x32xf32>
    %39 = vector.shape_cast %38 : vector<1x8x32xf32> to vector<8x32xf32>
    %40 = vector.shape_cast %36 : vector<8x32xf32> to vector<1x8x32xf32>
    tpu.vector_store %arg5[%37, %c0_12, %c0_13], %40 {strides = array<i32>} : memref<8x8x32xf32, #tpu.memory_space<vmem>>, vector<1x8x32xf32>,
    %c1_i32 = arith.constant 1 : i32
    %41 = arith.index_cast %c1_i32 : i32 to index
    %c0_14 = arith.constant 0 : index
    %c0_15 = arith.constant 0 : index
    %42 = vector.load %arg1[%41, %c0_14, %c0_15] : memref<8x8x128xf32, #tpu.memory_space<vmem>>, vector<1x8x128xf32>
    %43 = vector.shape_cast %42 : vector<1x8x128xf32> to vector<8x128xf32>
    %44 = arith.truncf %36 : vector<8x32xf32> to vector<8x32xbf16>
    %cst_16 = arith.constant dense<0.000000e+00> : vector<8x128xf32>
    %45 = tpu.matmul %44, %3, %cst_16 {dimension_numbers = #tpu.dot_dimension_numbers<[1], [0], [0], [1], [0, 0, 1, 1], [], []>} : vector<8x32xbf16>, vector<32x128xbf16>, vector<8x128xf32> -> vector<8x128xf32>
    %46 = arith.addf %43, %45 : vector<8x128xf32>
    %47 = vector.extract_strided_slice %46 {offsets = [0, 0], sizes = [8, 32], strides = [1, 1]} : vector<8x128xf32> to vector<8x32xf32>
    %48 = arith.negf %47 : vector<8x32xf32>
    %49 = math.exp %48 : vector<8x32xf32>
    %cst_17 = arith.constant 1.000000e+00 : f32
    %50 = vector.broadcast %cst_17 : f32 to vector<8x32xf32>
    %51 = arith.addf %50, %49 : vector<8x32xf32>
    %52 = arith.divf %50, %51 : vector<8x32xf32>
    %53 = vector.extract_strided_slice %46 {offsets = [0, 32], sizes = [8, 32], strides = [1, 1]} : vector<8x128xf32> to vector<8x32xf32>
    %54 = arith.negf %53 : vector<8x32xf32>
    %55 = math.exp %54 : vector<8x32xf32>
    %cst_18 = arith.constant 1.000000e+00 : f32
    %56 = vector.broadcast %cst_18 : f32 to vector<8x32xf32>
    %57 = arith.addf %56, %55 : vector<8x32xf32>
    %58 = arith.divf %56, %57 : vector<8x32xf32>
    %59 = vector.extract_strided_slice %46 {offsets = [0, 64], sizes = [8, 32], strides = [1, 1]} : vector<8x128xf32> to vector<8x32xf32>
    %60 = math.tanh %59 : vector<8x32xf32>
    %61 = vector.extract_strided_slice %46 {offsets = [0, 96], sizes = [8, 32], strides = [1, 1]} : vector<8x128xf32> to vector<8x32xf32>
    %62 = arith.negf %61 : vector<8x32xf32>
    %63 = math.exp %62 : vector<8x32xf32>
    %cst_19 = arith.constant 1.000000e+00 : f32
    %64 = vector.broadcast %cst_19 : f32 to vector<8x32xf32>
    %65 = arith.addf %64, %63 : vector<8x32xf32>
    %66 = arith.divf %64, %65 : vector<8x32xf32>
    %67 = arith.mulf %58, %34 : vector<8x32xf32>
    %68 = arith.mulf %52, %60 : vector<8x32xf32>
    %69 = arith.addf %67, %68 : vector<8x32xf32>
    %70 = math.tanh %69 : vector<8x32xf32>
    %71 = arith.mulf %66, %70 : vector<8x32xf32>
    %72 = arith.index_cast %c1_i32 : i32 to index
    %c0_20 = arith.constant 0 : index
    %c0_21 = arith.constant 0 : index
    %73 = vector.load %arg5[%72, %c0_20, %c0_21] : memref<8x8x32xf32, #tpu.memory_space<vmem>>, vector<1x8x32xf32>
    %74 = vector.shape_cast %73 : vector<1x8x32xf32> to vector<8x32xf32>
    %75 = vector.shape_cast %71 : vector<8x32xf32> to vector<1x8x32xf32>
    tpu.vector_store %arg5[%72, %c0_20, %c0_21], %75 {strides = array<i32>} : memref<8x8x32xf32, #tpu.memory_space<vmem>>, vector<1x8x32xf32>,
    %c2_i32 = arith.constant 2 : i32
    %76 = arith.index_cast %c2_i32 : i32 to index
    %c0_22 = arith.constant 0 : index
    %c0_23 = arith.constant 0 : index
    %77 = vector.load %arg1[%76, %c0_22, %c0_23] : memref<8x8x128xf32, #tpu.memory_space<vmem>>, vector<1x8x128xf32>
    %78 = vector.shape_cast %77 : vector<1x8x128xf32> to vector<8x128xf32>
    %79 = arith.truncf %71 : vector<8x32xf32> to vector<8x32xbf16>
    %cst_24 = arith.constant dense<0.000000e+00> : vector<8x128xf32>
    %80 = tpu.matmul %79, %3, %cst_24 {dimension_numbers = #tpu.dot_dimension_numbers<[1], [0], [0], [1], [0, 0, 1, 1], [], []>} : vector<8x32xbf16>, vector<32x128xbf16>, vector<8x128xf32> -> vector<8x128xf32>
    %81 = arith.addf %78, %80 : vector<8x128xf32>
    %82 = vector.extract_strided_slice %81 {offsets = [0, 0], sizes = [8, 32], strides = [1, 1]} : vector<8x128xf32> to vector<8x32xf32>
    %83 = arith.negf %82 : vector<8x32xf32>
    %84 = math.exp %83 : vector<8x32xf32>
    %cst_25 = arith.constant 1.000000e+00 : f32
    %85 = vector.broadcast %cst_25 : f32 to vector<8x32xf32>
    %86 = arith.addf %85, %84 : vector<8x32xf32>
    %87 = arith.divf %85, %86 : vector<8x32xf32>
    %88 = vector.extract_strided_slice %81 {offsets = [0, 32], sizes = [8, 32], strides = [1, 1]} : vector<8x128xf32> to vector<8x32xf32>
    %89 = arith.negf %88 : vector<8x32xf32>
    %90 = math.exp %89 : vector<8x32xf32>
    %cst_26 = arith.constant 1.000000e+00 : f32
    %91 = vector.broadcast %cst_26 : f32 to vector<8x32xf32>
    %92 = arith.addf %91, %90 : vector<8x32xf32>
    %93 = arith.divf %91, %92 : vector<8x32xf32>
    %94 = vector.extract_strided_slice %81 {offsets = [0, 64], sizes = [8, 32], strides = [1, 1]} : vector<8x128xf32> to vector<8x32xf32>
    %95 = math.tanh %94 : vector<8x32xf32>
    %96 = vector.extract_strided_slice %81 {offsets = [0, 96], sizes = [8, 32], strides = [1, 1]} : vector<8x128xf32> to vector<8x32xf32>
    %97 = arith.negf %96 : vector<8x32xf32>
    %98 = math.exp %97 : vector<8x32xf32>
    %cst_27 = arith.constant 1.000000e+00 : f32
    %99 = vector.broadcast %cst_27 : f32 to vector<8x32xf32>
    %100 = arith.addf %99, %98 : vector<8x32xf32>
    %101 = arith.divf %99, %100 : vector<8x32xf32>
    %102 = arith.mulf %93, %69 : vector<8x32xf32>
    %103 = arith.mulf %87, %95 : vector<8x32xf32>
    %104 = arith.addf %102, %103 : vector<8x32xf32>
    %105 = math.tanh %104 : vector<8x32xf32>
    %106 = arith.mulf %101, %105 : vector<8x32xf32>
    %107 = arith.index_cast %c2_i32 : i32 to index
    %c0_28 = arith.constant 0 : index
    %c0_29 = arith.constant 0 : index
    %108 = vector.load %arg5[%107, %c0_28, %c0_29] : memref<8x8x32xf32, #tpu.memory_space<vmem>>, vector<1x8x32xf32>
    %109 = vector.shape_cast %108 : vector<1x8x32xf32> to vector<8x32xf32>
    %110 = vector.shape_cast %106 : vector<8x32xf32> to vector<1x8x32xf32>
    tpu.vector_store %arg5[%107, %c0_28, %c0_29], %110 {strides = array<i32>} : memref<8x8x32xf32, #tpu.memory_space<vmem>>, vector<1x8x32xf32>,
    %c3_i32 = arith.constant 3 : i32
    %111 = arith.index_cast %c3_i32 : i32 to index
    %c0_30 = arith.constant 0 : index
    %c0_31 = arith.constant 0 : index
    %112 = vector.load %arg1[%111, %c0_30, %c0_31] : memref<8x8x128xf32, #tpu.memory_space<vmem>>, vector<1x8x128xf32>
    %113 = vector.shape_cast %112 : vector<1x8x128xf32> to vector<8x128xf32>
    %114 = arith.truncf %106 : vector<8x32xf32> to vector<8x32xbf16>
    %cst_32 = arith.constant dense<0.000000e+00> : vector<8x128xf32>
    %115 = tpu.matmul %114, %3, %cst_32 {dimension_numbers = #tpu.dot_dimension_numbers<[1], [0], [0], [1], [0, 0, 1, 1], [], []>} : vector<8x32xbf16>, vector<32x128xbf16>, vector<8x128xf32> -> vector<8x128xf32>
    %116 = arith.addf %113, %115 : vector<8x128xf32>
    %117 = vector.extract_strided_slice %116 {offsets = [0, 0], sizes = [8, 32], strides = [1, 1]} : vector<8x128xf32> to vector<8x32xf32>
    %118 = arith.negf %117 : vector<8x32xf32>
    %119 = math.exp %118 : vector<8x32xf32>
    %cst_33 = arith.constant 1.000000e+00 : f32
    %120 = vector.broadcast %cst_33 : f32 to vector<8x32xf32>
    %121 = arith.addf %120, %119 : vector<8x32xf32>
    %122 = arith.divf %120, %121 : vector<8x32xf32>
    %123 = vector.extract_strided_slice %116 {offsets = [0, 32], sizes = [8, 32], strides = [1, 1]} : vector<8x128xf32> to vector<8x32xf32>
    %124 = arith.negf %123 : vector<8x32xf32>
    %125 = math.exp %124 : vector<8x32xf32>
    %cst_34 = arith.constant 1.000000e+00 : f32
    %126 = vector.broadcast %cst_34 : f32 to vector<8x32xf32>
    %127 = arith.addf %126, %125 : vector<8x32xf32>
    %128 = arith.divf %126, %127 : vector<8x32xf32>
    %129 = vector.extract_strided_slice %116 {offsets = [0, 64], sizes = [8, 32], strides = [1, 1]} : vector<8x128xf32> to vector<8x32xf32>
    %130 = math.tanh %129 : vector<8x32xf32>
    %131 = vector.extract_strided_slice %116 {offsets = [0, 96], sizes = [8, 32], strides = [1, 1]} : vector<8x128xf32> to vector<8x32xf32>
    %132 = arith.negf %131 : vector<8x32xf32>
    %133 = math.exp %132 : vector<8x32xf32>
    %cst_35 = arith.constant 1.000000e+00 : f32
    %134 = vector.broadcast %cst_35 : f32 to vector<8x32xf32>
    %135 = arith.addf %134, %133 : vector<8x32xf32>
    %136 = arith.divf %134, %135 : vector<8x32xf32>
    %137 = arith.mulf %128, %104 : vector<8x32xf32>
    %138 = arith.mulf %122, %130 : vector<8x32xf32>
    %139 = arith.addf %137, %138 : vector<8x32xf32>
    %140 = math.tanh %139 : vector<8x32xf32>
    %141 = arith.mulf %136, %140 : vector<8x32xf32>
    %142 = arith.index_cast %c3_i32 : i32 to index
    %c0_36 = arith.constant 0 : index
    %c0_37 = arith.constant 0 : index
    %143 = vector.load %arg5[%142, %c0_36, %c0_37] : memref<8x8x32xf32, #tpu.memory_space<vmem>>, vector<1x8x32xf32>
    %144 = vector.shape_cast %143 : vector<1x8x32xf32> to vector<8x32xf32>
    %145 = vector.shape_cast %141 : vector<8x32xf32> to vector<1x8x32xf32>
    tpu.vector_store %arg5[%142, %c0_36, %c0_37], %145 {strides = array<i32>} : memref<8x8x32xf32, #tpu.memory_space<vmem>>, vector<1x8x32xf32>,
    %c4_i32 = arith.constant 4 : i32
    %146 = arith.index_cast %c4_i32 : i32 to index
    %c0_38 = arith.constant 0 : index
    %c0_39 = arith.constant 0 : index
    %147 = vector.load %arg1[%146, %c0_38, %c0_39] : memref<8x8x128xf32, #tpu.memory_space<vmem>>, vector<1x8x128xf32>
    %148 = vector.shape_cast %147 : vector<1x8x128xf32> to vector<8x128xf32>
    %149 = arith.truncf %141 : vector<8x32xf32> to vector<8x32xbf16>
    %cst_40 = arith.constant dense<0.000000e+00> : vector<8x128xf32>
    %150 = tpu.matmul %149, %3, %cst_40 {dimension_numbers = #tpu.dot_dimension_numbers<[1], [0], [0], [1], [0, 0, 1, 1], [], []>} : vector<8x32xbf16>, vector<32x128xbf16>, vector<8x128xf32> -> vector<8x128xf32>
    %151 = arith.addf %148, %150 : vector<8x128xf32>
    %152 = vector.extract_strided_slice %151 {offsets = [0, 0], sizes = [8, 32], strides = [1, 1]} : vector<8x128xf32> to vector<8x32xf32>
    %153 = arith.negf %152 : vector<8x32xf32>
    %154 = math.exp %153 : vector<8x32xf32>
    %cst_41 = arith.constant 1.000000e+00 : f32
    %155 = vector.broadcast %cst_41 : f32 to vector<8x32xf32>
    %156 = arith.addf %155, %154 : vector<8x32xf32>
    %157 = arith.divf %155, %156 : vector<8x32xf32>
    %158 = vector.extract_strided_slice %151 {offsets = [0, 32], sizes = [8, 32], strides = [1, 1]} : vector<8x128xf32> to vector<8x32xf32>
    %159 = arith.negf %158 : vector<8x32xf32>
    %160 = math.exp %159 : vector<8x32xf32>
    %cst_42 = arith.constant 1.000000e+00 : f32
    %161 = vector.broadcast %cst_42 : f32 to vector<8x32xf32>
    %162 = arith.addf %161, %160 : vector<8x32xf32>
    %163 = arith.divf %161, %162 : vector<8x32xf32>
    %164 = vector.extract_strided_slice %151 {offsets = [0, 64], sizes = [8, 32], strides = [1, 1]} : vector<8x128xf32> to vector<8x32xf32>
    %165 = math.tanh %164 : vector<8x32xf32>
    %166 = vector.extract_strided_slice %151 {offsets = [0, 96], sizes = [8, 32], strides = [1, 1]} : vector<8x128xf32> to vector<8x32xf32>
    %167 = arith.negf %166 : vector<8x32xf32>
    %168 = math.exp %167 : vector<8x32xf32>
    %cst_43 = arith.constant 1.000000e+00 : f32
    %169 = vector.broadcast %cst_43 : f32 to vector<8x32xf32>
    %170 = arith.addf %169, %168 : vector<8x32xf32>
    %171 = arith.divf %169, %170 : vector<8x32xf32>
    %172 = arith.mulf %163, %139 : vector<8x32xf32>
    %173 = arith.mulf %157, %165 : vector<8x32xf32>
    %174 = arith.addf %172, %173 : vector<8x32xf32>
    %175 = math.tanh %174 : vector<8x32xf32>
    %176 = arith.mulf %171, %175 : vector<8x32xf32>
    %177 = arith.index_cast %c4_i32 : i32 to index
    %c0_44 = arith.constant 0 : index
    %c0_45 = arith.constant 0 : index
    %178 = vector.load %arg5[%177, %c0_44, %c0_45] : memref<8x8x32xf32, #tpu.memory_space<vmem>>, vector<1x8x32xf32>
    %179 = vector.shape_cast %178 : vector<1x8x32xf32> to vector<8x32xf32>
    %180 = vector.shape_cast %176 : vector<8x32xf32> to vector<1x8x32xf32>
    tpu.vector_store %arg5[%177, %c0_44, %c0_45], %180 {strides = array<i32>} : memref<8x8x32xf32, #tpu.memory_space<vmem>>, vector<1x8x32xf32>,
    %c5_i32 = arith.constant 5 : i32
    %181 = arith.index_cast %c5_i32 : i32 to index
    %c0_46 = arith.constant 0 : index
    %c0_47 = arith.constant 0 : index
    %182 = vector.load %arg1[%181, %c0_46, %c0_47] : memref<8x8x128xf32, #tpu.memory_space<vmem>>, vector<1x8x128xf32>
    %183 = vector.shape_cast %182 : vector<1x8x128xf32> to vector<8x128xf32>
    %184 = arith.truncf %176 : vector<8x32xf32> to vector<8x32xbf16>
    %cst_48 = arith.constant dense<0.000000e+00> : vector<8x128xf32>
    %185 = tpu.matmul %184, %3, %cst_48 {dimension_numbers = #tpu.dot_dimension_numbers<[1], [0], [0], [1], [0, 0, 1, 1], [], []>} : vector<8x32xbf16>, vector<32x128xbf16>, vector<8x128xf32> -> vector<8x128xf32>
    %186 = arith.addf %183, %185 : vector<8x128xf32>
    %187 = vector.extract_strided_slice %186 {offsets = [0, 0], sizes = [8, 32], strides = [1, 1]} : vector<8x128xf32> to vector<8x32xf32>
    %188 = arith.negf %187 : vector<8x32xf32>
    %189 = math.exp %188 : vector<8x32xf32>
    %cst_49 = arith.constant 1.000000e+00 : f32
    %190 = vector.broadcast %cst_49 : f32 to vector<8x32xf32>
    %191 = arith.addf %190, %189 : vector<8x32xf32>
    %192 = arith.divf %190, %191 : vector<8x32xf32>
    %193 = vector.extract_strided_slice %186 {offsets = [0, 32], sizes = [8, 32], strides = [1, 1]} : vector<8x128xf32> to vector<8x32xf32>
    %194 = arith.negf %193 : vector<8x32xf32>
    %195 = math.exp %194 : vector<8x32xf32>
    %cst_50 = arith.constant 1.000000e+00 : f32
    %196 = vector.broadcast %cst_50 : f32 to vector<8x32xf32>
    %197 = arith.addf %196, %195 : vector<8x32xf32>
    %198 = arith.divf %196, %197 : vector<8x32xf32>
    %199 = vector.extract_strided_slice %186 {offsets = [0, 64], sizes = [8, 32], strides = [1, 1]} : vector<8x128xf32> to vector<8x32xf32>
    %200 = math.tanh %199 : vector<8x32xf32>
    %201 = vector.extract_strided_slice %186 {offsets = [0, 96], sizes = [8, 32], strides = [1, 1]} : vector<8x128xf32> to vector<8x32xf32>
    %202 = arith.negf %201 : vector<8x32xf32>
    %203 = math.exp %202 : vector<8x32xf32>
    %cst_51 = arith.constant 1.000000e+00 : f32
    %204 = vector.broadcast %cst_51 : f32 to vector<8x32xf32>
    %205 = arith.addf %204, %203 : vector<8x32xf32>
    %206 = arith.divf %204, %205 : vector<8x32xf32>
    %207 = arith.mulf %198, %174 : vector<8x32xf32>
    %208 = arith.mulf %192, %200 : vector<8x32xf32>
    %209 = arith.addf %207, %208 : vector<8x32xf32>
    %210 = math.tanh %209 : vector<8x32xf32>
    %211 = arith.mulf %206, %210 : vector<8x32xf32>
    %212 = arith.index_cast %c5_i32 : i32 to index
    %c0_52 = arith.constant 0 : index
    %c0_53 = arith.constant 0 : index
    %213 = vector.load %arg5[%212, %c0_52, %c0_53] : memref<8x8x32xf32, #tpu.memory_space<vmem>>, vector<1x8x32xf32>
    %214 = vector.shape_cast %213 : vector<1x8x32xf32> to vector<8x32xf32>
    %215 = vector.shape_cast %211 : vector<8x32xf32> to vector<1x8x32xf32>
    tpu.vector_store %arg5[%212, %c0_52, %c0_53], %215 {strides = array<i32>} : memref<8x8x32xf32, #tpu.memory_space<vmem>>, vector<1x8x32xf32>,
    %c6_i32 = arith.constant 6 : i32
    %216 = arith.index_cast %c6_i32 : i32 to index
    %c0_54 = arith.constant 0 : index
    %c0_55 = arith.constant 0 : index
    %217 = vector.load %arg1[%216, %c0_54, %c0_55] : memref<8x8x128xf32, #tpu.memory_space<vmem>>, vector<1x8x128xf32>
    %218 = vector.shape_cast %217 : vector<1x8x128xf32> to vector<8x128xf32>
    %219 = arith.truncf %211 : vector<8x32xf32> to vector<8x32xbf16>
    %cst_56 = arith.constant dense<0.000000e+00> : vector<8x128xf32>
    %220 = tpu.matmul %219, %3, %cst_56 {dimension_numbers = #tpu.dot_dimension_numbers<[1], [0], [0], [1], [0, 0, 1, 1], [], []>} : vector<8x32xbf16>, vector<32x128xbf16>, vector<8x128xf32> -> vector<8x128xf32>
    %221 = arith.addf %218, %220 : vector<8x128xf32>
    %222 = vector.extract_strided_slice %221 {offsets = [0, 0], sizes = [8, 32], strides = [1, 1]} : vector<8x128xf32> to vector<8x32xf32>
    %223 = arith.negf %222 : vector<8x32xf32>
    %224 = math.exp %223 : vector<8x32xf32>
    %cst_57 = arith.constant 1.000000e+00 : f32
    %225 = vector.broadcast %cst_57 : f32 to vector<8x32xf32>
    %226 = arith.addf %225, %224 : vector<8x32xf32>
    %227 = arith.divf %225, %226 : vector<8x32xf32>
    %228 = vector.extract_strided_slice %221 {offsets = [0, 32], sizes = [8, 32], strides = [1, 1]} : vector<8x128xf32> to vector<8x32xf32>
    %229 = arith.negf %228 : vector<8x32xf32>
    %230 = math.exp %229 : vector<8x32xf32>
    %cst_58 = arith.constant 1.000000e+00 : f32
    %231 = vector.broadcast %cst_58 : f32 to vector<8x32xf32>
    %232 = arith.addf %231, %230 : vector<8x32xf32>
    %233 = arith.divf %231, %232 : vector<8x32xf32>
    %234 = vector.extract_strided_slice %221 {offsets = [0, 64], sizes = [8, 32], strides = [1, 1]} : vector<8x128xf32> to vector<8x32xf32>
    %235 = math.tanh %234 : vector<8x32xf32>
    %236 = vector.extract_strided_slice %221 {offsets = [0, 96], sizes = [8, 32], strides = [1, 1]} : vector<8x128xf32> to vector<8x32xf32>
    %237 = arith.negf %236 : vector<8x32xf32>
    %238 = math.exp %237 : vector<8x32xf32>
    %cst_59 = arith.constant 1.000000e+00 : f32
    %239 = vector.broadcast %cst_59 : f32 to vector<8x32xf32>
    %240 = arith.addf %239, %238 : vector<8x32xf32>
    %241 = arith.divf %239, %240 : vector<8x32xf32>
    %242 = arith.mulf %233, %209 : vector<8x32xf32>
    %243 = arith.mulf %227, %235 : vector<8x32xf32>
    %244 = arith.addf %242, %243 : vector<8x32xf32>
    %245 = math.tanh %244 : vector<8x32xf32>
    %246 = arith.mulf %241, %245 : vector<8x32xf32>
    %247 = arith.index_cast %c6_i32 : i32 to index
    %c0_60 = arith.constant 0 : index
    %c0_61 = arith.constant 0 : index
    %248 = vector.load %arg5[%247, %c0_60, %c0_61] : memref<8x8x32xf32, #tpu.memory_space<vmem>>, vector<1x8x32xf32>
    %249 = vector.shape_cast %248 : vector<1x8x32xf32> to vector<8x32xf32>
    %250 = vector.shape_cast %246 : vector<8x32xf32> to vector<1x8x32xf32>
    tpu.vector_store %arg5[%247, %c0_60, %c0_61], %250 {strides = array<i32>} : memref<8x8x32xf32, #tpu.memory_space<vmem>>, vector<1x8x32xf32>,
    %c7_i32 = arith.constant 7 : i32
    %251 = arith.index_cast %c7_i32 : i32 to index
    %c0_62 = arith.constant 0 : index
    %c0_63 = arith.constant 0 : index
    %252 = vector.load %arg1[%251, %c0_62, %c0_63] : memref<8x8x128xf32, #tpu.memory_space<vmem>>, vector<1x8x128xf32>
    %253 = vector.shape_cast %252 : vector<1x8x128xf32> to vector<8x128xf32>
    %254 = arith.truncf %246 : vector<8x32xf32> to vector<8x32xbf16>
    %cst_64 = arith.constant dense<0.000000e+00> : vector<8x128xf32>
    %255 = tpu.matmul %254, %3, %cst_64 {dimension_numbers = #tpu.dot_dimension_numbers<[1], [0], [0], [1], [0, 0, 1, 1], [], []>} : vector<8x32xbf16>, vector<32x128xbf16>, vector<8x128xf32> -> vector<8x128xf32>
    %256 = arith.addf %253, %255 : vector<8x128xf32>
    %257 = vector.extract_strided_slice %256 {offsets = [0, 0], sizes = [8, 32], strides = [1, 1]} : vector<8x128xf32> to vector<8x32xf32>
    %258 = arith.negf %257 : vector<8x32xf32>
    %259 = math.exp %258 : vector<8x32xf32>
    %cst_65 = arith.constant 1.000000e+00 : f32
    %260 = vector.broadcast %cst_65 : f32 to vector<8x32xf32>
    %261 = arith.addf %260, %259 : vector<8x32xf32>
    %262 = arith.divf %260, %261 : vector<8x32xf32>
    %263 = vector.extract_strided_slice %256 {offsets = [0, 32], sizes = [8, 32], strides = [1, 1]} : vector<8x128xf32> to vector<8x32xf32>
    %264 = arith.negf %263 : vector<8x32xf32>
    %265 = math.exp %264 : vector<8x32xf32>
    %cst_66 = arith.constant 1.000000e+00 : f32
    %266 = vector.broadcast %cst_66 : f32 to vector<8x32xf32>
    %267 = arith.addf %266, %265 : vector<8x32xf32>
    %268 = arith.divf %266, %267 : vector<8x32xf32>
    %269 = vector.extract_strided_slice %256 {offsets = [0, 64], sizes = [8, 32], strides = [1, 1]} : vector<8x128xf32> to vector<8x32xf32>
    %270 = math.tanh %269 : vector<8x32xf32>
    %271 = vector.extract_strided_slice %256 {offsets = [0, 96], sizes = [8, 32], strides = [1, 1]} : vector<8x128xf32> to vector<8x32xf32>
    %272 = arith.negf %271 : vector<8x32xf32>
    %273 = math.exp %272 : vector<8x32xf32>
    %cst_67 = arith.constant 1.000000e+00 : f32
    %274 = vector.broadcast %cst_67 : f32 to vector<8x32xf32>
    %275 = arith.addf %274, %273 : vector<8x32xf32>
    %276 = arith.divf %274, %275 : vector<8x32xf32>
    %277 = arith.mulf %268, %244 : vector<8x32xf32>
    %278 = arith.mulf %262, %270 : vector<8x32xf32>
    %279 = arith.addf %277, %278 : vector<8x32xf32>
    %280 = math.tanh %279 : vector<8x32xf32>
    %281 = arith.mulf %276, %280 : vector<8x32xf32>
    %282 = arith.index_cast %c7_i32 : i32 to index
    %c0_68 = arith.constant 0 : index
    %c0_69 = arith.constant 0 : index
    %283 = vector.load %arg5[%282, %c0_68, %c0_69] : memref<8x8x32xf32, #tpu.memory_space<vmem>>, vector<1x8x32xf32>
    %284 = vector.shape_cast %283 : vector<1x8x32xf32> to vector<8x32xf32>
    %285 = vector.shape_cast %281 : vector<8x32xf32> to vector<1x8x32xf32>
    tpu.vector_store %arg5[%282, %c0_68, %c0_69], %285 {strides = array<i32>} : memref<8x8x32xf32, #tpu.memory_space<vmem>>, vector<1x8x32xf32>,
    %c8_i32 = arith.constant 8 : i32
    %c0_70 = arith.constant 0 : index
    %c0_71 = arith.constant 0 : index
    %286 = vector.load %arg7[%c0_70, %c0_71] : memref<8x32xf32, #tpu.memory_space<vmem>>, vector<8x32xf32>
    tpu.vector_store %arg7[%c0_70, %c0_71], %281 {strides = array<i32>} : memref<8x32xf32, #tpu.memory_space<vmem>>, vector<8x32xf32>,
    %c0_72 = arith.constant 0 : index
    %c0_73 = arith.constant 0 : index
    %287 = vector.load %arg8[%c0_72, %c0_73] : memref<8x32xf32, #tpu.memory_space<vmem>>, vector<8x32xf32>
    tpu.vector_store %arg8[%c0_72, %c0_73], %279 {strides = array<i32>} : memref<8x32xf32, #tpu.memory_space<vmem>>, vector<8x32xf32>,
    %c0_i32_74 = arith.constant 0 : i32
    %288 = arith.cmpi eq, %arg0, %c0_i32_74 : i32
    %289 = arith.extui %288 : i1 to i32
    %c0_i32_75 = arith.constant 0 : i32
    %290 = arith.cmpi ne, %289, %c0_i32_75 : i32
    scf.if %290 {
      %c0_76 = arith.constant 0 : index
      %c0_77 = arith.constant 0 : index
      %291 = vector.load %arg6[%c0_76, %c0_77] : memref<8x32xf32, #tpu.memory_space<vmem>>, vector<8x32xf32>
      tpu.vector_store %arg6[%c0_76, %c0_77], %279 {strides = array<i32>} : memref<8x32xf32, #tpu.memory_space<vmem>>, vector<8x32xf32>,
    } else {
    }
    return
  }
  func.func @transform_0(%arg0: i32) -> (i32, i32, i32) {
    %c0_i32 = arith.constant 0 : i32
    %c0_i32_0 = arith.constant 0 : i32
    %c0_i32_1 = arith.constant 0 : i32
    return %arg0, %c0_i32, %c0_i32_0 : i32, i32, i32
  }
  func.func @transform_1(%arg0: i32) -> (i32, i32) {
    %c0_i32 = arith.constant 0 : i32
    %c0_i32_0 = arith.constant 0 : i32
    %c0_i32_1 = arith.constant 0 : i32
    return %c0_i32, %c0_i32_0 : i32, i32
  }
  func.func @transform_2(%arg0: i32) -> (i32, i32) {
    %c0_i32 = arith.constant 0 : i32
    %c0_i32_0 = arith.constant 0 : i32
    %c0_i32_1 = arith.constant 0 : i32
    return %c0_i32, %c0_i32_0 : i32, i32
  }
  func.func @transform_3(%arg0: i32) -> (i32, i32) {
    %c0_i32 = arith.constant 0 : i32
    %c0_i32_0 = arith.constant 0 : i32
    %c0_i32_1 = arith.constant 0 : i32
    return %c0_i32, %c0_i32_0 : i32, i32
  }
  func.func @transform_4(%arg0: i32) -> (i32, i32, i32) {
    %c0_i32 = arith.constant 0 : i32
    %c0_i32_0 = arith.constant 0 : i32
    %c0_i32_1 = arith.constant 0 : i32
    return %arg0, %c0_i32, %c0_i32_0 : i32, i32, i32
  }
  func.func @transform_5(%arg0: i32) -> (i32, i32) {
    %c0_i32 = arith.constant 0 : i32
    %c0_i32_0 = arith.constant 0 : i32
    %c0_i32_1 = arith.constant 0 : i32
    return %c0_i32, %c0_i32_0 : i32, i32
  }
}

</mosaic_0001>

<llo_original>
// kernel: tpu_custom_call.1
$region0: #{tpu_custom_call.1}
  #allocation0 [shape = 'u32[]', space=smem, size = 0x4, offset = 0x4, fixed_abs, tag = 'smem constant byte address 0x4 - core index']
  #allocation1 [shape = 'u32[144,128]{1,0:T(1,128)}', space=vmem, size = 0x12000, scoped, tag = 'internal scratch']
  #allocation2 [shape = 'f32[8,32]{1,0:T(8,128)}', space=vmem, size = 0x1000, scoped, tag = 'scratch operand']
  #allocation3 [shape = 'f32[8,32]{1,0:T(8,128)}', space=vmem, size = 0x1000, scoped, tag = 'scratch operand']
  %s0 = inlined_call_operand.hbm [shape: f32[8,8,128], index: 0, kind: input, shape index: {}]
  %s1 = inlined_call_operand.hbm [shape: bf16[32,128], index: 1, kind: input, shape index: {}]
  %s2 = inlined_call_operand.hbm [shape: f32[8,32], index: 2, kind: input, shape index: {}]
  %s3 = inlined_call_operand.hbm [shape: f32[8,32], index: 3, kind: input, shape index: {}]
  %s4 = inlined_call_operand.hbm [shape: f32[8,8,32], index: 4, kind: output, shape index: {0}]
  %s5 = inlined_call_operand.hbm [shape: f32[8,32], index: 5, kind: output, shape index: {1}]
  %6 = xla_tuple %s4, %s5
  %s7 = sld [smem:[#allocation0]]
  $region58: #{tpu_custom_call.1} parent=0
    _
  %s9 = ssub.s32 1, %s7
  %s10 = scalar_select 0, %s9, %s7
  $region1: #{tpu_custom_call.1} parent=0
    #allocation4 [shape = 'u8[32768]{0}', space=vmem, size = 0x8000, scoped, tag = 'input window, operand 0, single buffered']
    #allocation5 [shape = 's32[1]{0}', space=sflag, size = 0x4, scoped, tag = 'scoped memory for tpu_custom_call.1']
    #allocation6 [shape = 's32[1]{0}', space=sflag, size = 0x4, scoped, tag = 'scoped memory for tpu_custom_call.1']
    #allocation7 [shape = 'u8[8192]{0}', space=vmem, size = 0x2000, scoped, tag = 'input window, operand 1, single buffered']
    #allocation8 [shape = 's32[1]{0}', space=sflag, size = 0x4, scoped, tag = 'scoped memory for tpu_custom_call.1']
    #allocation9 [shape = 'u8[4096]{0}', space=vmem, size = 0x1000, scoped, tag = 'input window, operand 2, single buffered']
    #allocation10 [shape = 'u8[4096]{0}', space=vmem, size = 0x1000, scoped, tag = 'input window, operand 3, single buffered']
    #allocation11 [shape = 's32[1]{0}', space=sflag, size = 0x4, scoped, tag = 'scoped memory for tpu_custom_call.1']
    #allocation12 [shape = 'u8[32768]{0}', space=vmem, size = 0x8000, scoped, tag = 'output window, operand 0, single buffered']
    #allocation13 [shape = 'u8[4096]{0}', space=vmem, size = 0x1000, scoped, tag = 'output window, operand 1, single buffered']
    #allocation14 [shape = 's32[1]{0}', space=sflag, size = 0x4, scoped, tag = 'scoped memory for tpu_custom_call.1']
    %11 = vsyncpa [#allocation5], 0
    %12 = vsyncpa [#allocation8], 0
    %13 = vsyncpa [#allocation11], 0
    %14 = vsyncpa [#allocation6], 0
    %15 = vsyncpa [#allocation14], 0
    // Predicated region
    $region2: #{tpu_custom_call.1} parent=1 // pred_check
      _
    $region3: #{tpu_custom_call.1} parent=1 // pred_check_branch
      %17 = sbr.rel (0) target = $region5
    $region4: #{tpu_custom_call.1} parent=1 // pred_region
      %s19 = ssub.s32 1024, 1024
      %20 = vsyncadd [#allocation5], %s19
      %s21 = sshll.u32 [#allocation4], 4
      %s22 = int_to_ptr.vmem [resolvable:$true] %s21
      %27 = dma.hbm_to_vmem [thread:$0]  %s0, 1024, %s22, [#allocation5], 128, 128, 8
    $region5: #{tpu_custom_call.1} parent=1 // pred_fallthru
      _
    // Predicated region
    $region6: #{tpu_custom_call.1} parent=1 // pred_check
      _
    $region7: #{tpu_custom_call.1} parent=1 // pred_check_branch
      %29 = sbr.rel (0) target = $region9
    $region8: #{tpu_custom_call.1} parent=1 // pred_region
      %s31 = ssub.s32 256, 256
      %32 = vsyncadd [#allocation8], %s31
      %s33 = sshll.u32 [#allocation7], 4
      %s34 = int_to_ptr.vmem [resolvable:$true] %s33
      %39 = dma.hbm_to_vmem [thread:$0]  %s1, 256, %s34, [#allocation8], 64, 64, 4
    $region9: #{tpu_custom_call.1} parent=1 // pred_fallthru
      _
    // Predicated region
    $region10: #{tpu_custom_call.1} parent=1 // pred_check
      _
    $region11: #{tpu_custom_call.1} parent=1 // pred_check_branch
      %41 = sbr.rel (0) target = $region13
    $region12: #{tpu_custom_call.1} parent=1 // pred_region
      %s43 = ssub.s32 128, 128
      %44 = vsyncadd [#allocation8], %s43
      %s46 = sshll.u32 [#allocation9], 4
      %s47 = int_to_ptr.vmem [resolvable:$true] %s46
      %49 = dma.hbm_to_vmem [thread:$0]  %s2, 128, %s47, [#allocation8]
    $region13: #{tpu_custom_call.1} parent=1 // pred_fallthru
      _
    // Predicated region
    $region14: #{tpu_custom_call.1} parent=1 // pred_check
      _
    $region15: #{tpu_custom_call.1} parent=1 // pred_check_branch
      %51 = sbr.rel (0) target = $region17
    $region16: #{tpu_custom_call.1} parent=1 // pred_region
      %s53 = ssub.s32 128, 128
      %54 = vsyncadd [#allocation11], %s53
      %s56 = sshll.u32 [#allocation10], 4
      %s57 = int_to_ptr.vmem [resolvable:$true] %s56
      %59 = dma.hbm_to_vmem [thread:$0]  %s3, 128, %s57, [#allocation11]
    $region17: #{tpu_custom_call.1} parent=1 // pred_fallthru
      _
    // Predicated region
    $region18: #{tpu_custom_call.1} parent=1 // pred_check
      _
    $region19: #{tpu_custom_call.1} parent=1 // pred_check_branch
      %61 = sbr.rel (0) target = $region21
    $region20: #{tpu_custom_call.1} parent=1 // pred_region
      %62 = dma.done [#allocation5], 1024
    $region21: #{tpu_custom_call.1} parent=1 // pred_fallthru
      _
    // Predicated region
    $region22: #{tpu_custom_call.1} parent=1 // pred_check
      _
    $region23: #{tpu_custom_call.1} parent=1 // pred_check_branch
      %64 = sbr.rel (0) target = $region25
    $region24: #{tpu_custom_call.1} parent=1 // pred_region
      %65 = dma.done [#allocation8], 256
    $region25: #{tpu_custom_call.1} parent=1 // pred_fallthru
      _
    // Predicated region
    $region26: #{tpu_custom_call.1} parent=1 // pred_check
      _
    $region27: #{tpu_custom_call.1} parent=1 // pred_check_branch
      %67 = sbr.rel (0) target = $region29
    $region28: #{tpu_custom_call.1} parent=1 // pred_region
      %68 = dma.done [#allocation8], 128
    $region29: #{tpu_custom_call.1} parent=1 // pred_fallthru
      _
    // Predicated region
    $region30: #{tpu_custom_call.1} parent=1 // pred_check
      _
    $region31: #{tpu_custom_call.1} parent=1 // pred_check_branch
      %70 = sbr.rel (0) target = $region33
    $region32: #{tpu_custom_call.1} parent=1 // pred_region
      %71 = dma.done [#allocation11], 128
    $region33: #{tpu_custom_call.1} parent=1 // pred_fallthru
      _
    %p73 = scmp.eq.s32.totalorder 0, 0
    // Predicated region
    $region34: #{tpu_custom_call.1} parent=1 // pred_check
      %p74 = pneg %p73
    $region35: #{tpu_custom_call.1} parent=1 // pred_check_branch
      %76 = sbr.rel (%p74) target = $region37
    $region36: #{tpu_custom_call.1} parent=1 // pred_region
      %v77 = vld [vmem:[#allocation9] sm:$0xff]
      %vm78 = vcmask 261120
      %79 = vst.msk [vmem:[#allocation2] sm:$0xff] %vm78, %v77
      %v80 = vld [vmem:[#allocation10] sm:$0xff]
      %81 = vst.msk [vmem:[#allocation3] sm:$0xff] %vm78, %v80
    $region37: #{tpu_custom_call.1} parent=1 // pred_fallthru
      _
    %v82 = vld [vmem:[#allocation7] sm:$0xf]
    %v83 = vld [vmem:[#allocation7 + $0x4] sm:$0xf]
    %v84 = vld [vmem:[#allocation7 + $0x8] sm:$0xf]
    %v85 = vld [vmem:[#allocation7 + $0xc] sm:$0xf]
    %v86 = vld [vmem:[#allocation2] sm:$0xff]
    %v87 = vld [vmem:[#allocation3] sm:$0xff]
    %v88 = vld [vmem:[#allocation4] sm:$0xff]
    %v89 = vpack.c.bf16 %v86, %v86
    %v94 = vunpack.c.l.b16 %v82
    %v95 = vunpack.c.l.b16 %v83
    %v96 = vunpack.c.l.b16 %v84
    %v97 = vunpack.c.l.b16 %v85
    %v98 = vpack.c.b16 %v95, %v94
    %v99 = vpack.c.b16 %v97, %v96
    %vm102 = vcmask 261120
    %v104 = vsel %vm102, %v89, 0
    %106 = vmatprep.subr.bf16.mxu0 0
    %107 = vmatpush1.bf16.msra.mxu0 %v98
    %108 = vmatprep.subr.bf16.mxu0 0
    %109 = vmatpush1.bf16.msra.mxu0 %v99
    %110 = vmatprep.subr.bf16.mxu0 0
    %111 = vmatpush1.bf16.msra.mxu0 0
    %112 = vmatprep.subr.bf16.mxu0 0
    %113 = vmatpush1.bf16.msra.mxu0 0
    %114 = vmatprep.subr.bf16.mxu0 0
    %115 = vmatpush1.bf16.msra.mxu0 0
    %116 = vmatprep.subr.bf16.mxu0 0
    %117 = vmatpush1.bf16.msra.mxu0 0
    %118 = vmatprep.subr.bf16.mxu0 0
    %119 = vmatpush1.bf16.msra.mxu0 0
    %120 = vmatprep.subr.bf16.mxu0 0
    %121 = vmatpush1.bf16.msra.mxu0 0
    %122 = vmatprep.subr.bf16.mxu0 0
    %123 = vmatpush1.bf16.msra.mxu0 0
    %124 = vmatprep.subr.bf16.mxu0 0
    %125 = vmatpush1.bf16.msra.mxu0 0
    %126 = vmatprep.subr.bf16.mxu0 0
    %127 = vmatpush1.bf16.msra.mxu0 0
    %128 = vmatprep.subr.bf16.mxu0 0
    %129 = vmatpush1.bf16.msra.mxu0 0
    %130 = vmatprep.subr.bf16.mxu0 0
    %131 = vmatpush1.bf16.msra.mxu0 0
    %132 = vmatprep.subr.bf16.mxu0 0
    %133 = vmatpush1.bf16.msra.mxu0 0
    %134 = vmatprep.subr.bf16.mxu0 0
    %135 = vmatpush1.bf16.msra.mxu0 0
    %136 = vmatprep.subr.bf16.mxu0 0
    %137 = vmatpush1.bf16.msra.mxu0 0
    %138 = vmatprep.mubr.bf16.mxu0 0
    %139 = vmatmul.mubr.bf16.gmra.mrb[0].mxu0 %v104
    %v140 = vpop.f32.mrb[0].mxu0
    %v141 = vadd.f32 0.0, %v140
    %v142 = vpop.f32.mrb[0].mxu0
    %v143 = vpop.f32.mrb[0].mxu0
    %v144 = vpop.f32.mrb[0].mxu0
    %145 = vdwg.mxu0
    %v146 = vadd.f32 %v88, %v141
    %v147 = vxor.u32 %v146, 2147483648
    %v148 = vmul.f32 %v147, 1.442695
    %v149 = vpow.pop %v148
    %v150 = vadd.f32 %v149, 1.0
    %v151 = vrcp.pop %v150
    %v152 = vmul.f32 1.0, %v151
    %v153 = vtanh.pop %v146
    %155 = vrot.lane.b32.xlu0 %v87, 32
    %v156 = vpop.permute.xlu0 %155
    %v158 = vmul.f32 %v152, %v156
    %160 = vrot.lane.b32.xlu0 %v153, 64
    %v161 = vpop.permute.xlu0 %160
    %v163 = vmul.f32 %v152, %v161
    %165 = vrot.lane.b32.xlu0 %v163, 32
    %v166 = vpop.permute.xlu0 %165
    %v168 = vadd.f32 %v158, %v166
    %v169 = vtanh.pop %v168
    %171 = vrot.lane.b32.xlu0 %v169, 64
    %v172 = vpop.permute.xlu0 %171
    %v174 = vmul.f32 %v152, %v172
    %176 = vrot.lane.b32.xlu0 %v174, 32
    %v177 = vpop.permute.xlu0 %176
    %179 = vst.msk [vmem:[#allocation12] sm:$0xff] %vm102, %v177
    %s180 = scalar_lea.vmem [#allocation4], 8
    %v181 = vld [vmem:[%s180] sm:$0xff]
    %v182 = vpack.c.bf16 %v174, %v174
    %184 = vrot.lane.b32.xlu0 %v182, 32
    %v185 = vpop.permute.xlu0 %184
    %v187 = vsel %vm102, %v185, 0
    %189 = vmatprep.subr.bf16.mxu0 0
    %190 = vmatpush1.bf16.msra.mxu0 %v98
    %191 = vmatprep.subr.bf16.mxu0 0
    %192 = vmatpush1.bf16.msra.mxu0 %v99
    %193 = vmatprep.subr.bf16.mxu0 0
    %194 = vmatpush1.bf16.msra.mxu0 0
    %195 = vmatprep.subr.bf16.mxu0 0
    %196 = vmatpush1.bf16.msra.mxu0 0
    %197 = vmatprep.subr.bf16.mxu0 0
    %198 = vmatpush1.bf16.msra.mxu0 0
    %199 = vmatprep.subr.bf16.mxu0 0
    %200 = vmatpush1.bf16.msra.mxu0 0
    %201 = vmatprep.subr.bf16.mxu0 0
    %202 = vmatpush1.bf16.msra.mxu0 0
    %203 = vmatprep.subr.bf16.mxu0 0
    %204 = vmatpush1.bf16.msra.mxu0 0
    %205 = vmatprep.subr.bf16.mxu0 0
    %206 = vmatpush1.bf16.msra.mxu0 0
    %207 = vmatprep.subr.bf16.mxu0 0
    %208 = vmatpush1.bf16.msra.mxu0 0
    %209 = vmatprep.subr.bf16.mxu0 0
    %210 = vmatpush1.bf16.msra.mxu0 0
    %211 = vmatprep.subr.bf16.mxu0 0
    %212 = vmatpush1.bf16.msra.mxu0 0
    %213 = vmatprep.subr.bf16.mxu0 0
    %214 = vmatpush1.bf16.msra.mxu0 0
    %215 = vmatprep.subr.bf16.mxu0 0
    %216 = vmatpush1.bf16.msra.mxu0 0
    %217 = vmatprep.subr.bf16.mxu0 0
    %218 = vmatpush1.bf16.msra.mxu0 0
    %219 = vmatprep.subr.bf16.mxu0 0
    %220 = vmatpush1.bf16.msra.mxu0 0
    %221 = vmatprep.mubr.bf16.mxu0 0
    %222 = vmatmul.mubr.bf16.gmra.mrb[0].mxu0 %v187
    %v223 = vpop.f32.mrb[0].mxu0
    %v224 = vadd.f32 0.0, %v223
    %v225 = vpop.f32.mrb[0].mxu0
    %v226 = vpop.f32.mrb[0].mxu0
    %v227 = vpop.f32.mrb[0].mxu0
    %228 = vdwg.mxu0
    %v229 = vadd.f32 %v181, %v224
    %v230 = vxor.u32 %v229, 2147483648
    %v231 = vmul.f32 %v230, 1.442695
    %v232 = vpow.pop %v231
    %v233 = vadd.f32 %v232, 1.0
    %v234 = vrcp.pop %v233
    %v235 = vmul.f32 1.0, %v234
    %v236 = vtanh.pop %v229
    %v237 = vmul.f32 %v235, %v168
    %239 = vrot.lane.b32.xlu0 %v236, 64
    %v240 = vpop.permute.xlu0 %239
    %v242 = vmul.f32 %v235, %v240
    %244 = vrot.lane.b32.xlu0 %v242, 32
    %v245 = vpop.permute.xlu0 %244
    %v247 = vadd.f32 %v237, %v245
    %v248 = vtanh.pop %v247
    %250 = vrot.lane.b32.xlu0 %v248, 64
    %v251 = vpop.permute.xlu0 %250
    %v253 = vmul.f32 %v235, %v251
    %255 = vrot.lane.b32.xlu0 %v253, 32
    %v256 = vpop.permute.xlu0 %255
    %s258 = scalar_lea.vmem [#allocation12], 8
    %259 = vst.msk [vmem:[%s258] sm:$0xff] %vm102, %v256
    %s260 = scalar_lea.vmem [#allocation4], 16
    %v261 = vld [vmem:[%s260] sm:$0xff]
    %v262 = vpack.c.bf16 %v253, %v253
    %264 = vrot.lane.b32.xlu0 %v262, 32
    %v265 = vpop.permute.xlu0 %264
    %v267 = vsel %vm102, %v265, 0
    %269 = vmatprep.subr.bf16.mxu0 0
    %270 = vmatpush1.bf16.msra.mxu0 %v98
    %271 = vmatprep.subr.bf16.mxu0 0
    %272 = vmatpush1.bf16.msra.mxu0 %v99
    %273 = vmatprep.subr.bf16.mxu0 0
    %274 = vmatpush1.bf16.msra.mxu0 0
    %275 = vmatprep.subr.bf16.mxu0 0
    %276 = vmatpush1.bf16.msra.mxu0 0
    %277 = vmatprep.subr.bf16.mxu0 0
    %278 = vmatpush1.bf16.msra.mxu0 0
    %279 = vmatprep.subr.bf16.mxu0 0
    %280 = vmatpush1.bf16.msra.mxu0 0
    %281 = vmatprep.subr.bf16.mxu0 0
    %282 = vmatpush1.bf16.msra.mxu0 0
    %283 = vmatprep.subr.bf16.mxu0 0
    %284 = vmatpush1.bf16.msra.mxu0 0
    %285 = vmatprep.subr.bf16.mxu0 0
    %286 = vmatpush1.bf16.msra.mxu0 0
    %287 = vmatprep.subr.bf16.mxu0 0
    %288 = vmatpush1.bf16.msra.mxu0 0
    %289 = vmatprep.subr.bf16.mxu0 0
    %290 = vmatpush1.bf16.msra.mxu0 0
    %291 = vmatprep.subr.bf16.mxu0 0
    %292 = vmatpush1.bf16.msra.mxu0 0
    %293 = vmatprep.subr.bf16.mxu0 0
    %294 = vmatpush1.bf16.msra.mxu0 0
    %295 = vmatprep.subr.bf16.mxu0 0
    %296 = vmatpush1.bf16.msra.mxu0 0
    %297 = vmatprep.subr.bf16.mxu0 0
    %298 = vmatpush1.bf16.msra.mxu0 0
    %299 = vmatprep.subr.bf16.mxu0 0
    %300 = vmatpush1.bf16.msra.mxu0 0
    %301 = vmatprep.mubr.bf16.mxu0 0
    %302 = vmatmul.mubr.bf16.gmra.mrb[0].mxu0 %v267
    %v303 = vpop.f32.mrb[0].mxu0
    %v304 = vadd.f32 0.0, %v303
    %v305 = vpop.f32.mrb[0].mxu0
    %v306 = vpop.f32.mrb[0].mxu0
    %v307 = vpop.f32.mrb[0].mxu0
    %308 = vdwg.mxu0
    %v309 = vadd.f32 %v261, %v304
    %v310 = vxor.u32 %v309, 2147483648
    %v311 = vmul.f32 %v310, 1.442695
    %v312 = vpow.pop %v311
    %v313 = vadd.f32 %v312, 1.0
    %v314 = vrcp.pop %v313
    %v315 = vmul.f32 1.0, %v314
    %v316 = vtanh.pop %v309
    %v317 = vmul.f32 %v315, %v247
    %319 = vrot.lane.b32.xlu0 %v316, 64
    %v320 = vpop.permute.xlu0 %319
    %v322 = vmul.f32 %v315, %v320
    %324 = vrot.lane.b32.xlu0 %v322, 32
    %v325 = vpop.permute.xlu0 %324
    %v327 = vadd.f32 %v317, %v325
    %v328 = vtanh.pop %v327
    %330 = vrot.lane.b32.xlu0 %v328, 64
    %v331 = vpop.permute.xlu0 %330
    %v333 = vmul.f32 %v315, %v331
    %335 = vrot.lane.b32.xlu0 %v333, 32
    %v336 = vpop.permute.xlu0 %335
    %s338 = scalar_lea.vmem [#allocation12], 16
    %339 = vst.msk [vmem:[%s338] sm:$0xff] %vm102, %v336
    %s340 = scalar_lea.vmem [#allocation4], 24
    %v341 = vld [vmem:[%s340] sm:$0xff]
    %v342 = vpack.c.bf16 %v333, %v333
    %344 = vrot.lane.b32.xlu0 %v342, 32
    %v345 = vpop.permute.xlu0 %344
    %v347 = vsel %vm102, %v345, 0
    %349 = vmatprep.subr.bf16.mxu0 0
    %350 = vmatpush1.bf16.msra.mxu0 %v98
    %351 = vmatprep.subr.bf16.mxu0 0
    %352 = vmatpush1.bf16.msra.mxu0 %v99
    %353 = vmatprep.subr.bf16.mxu0 0
    %354 = vmatpush1.bf16.msra.mxu0 0
    %355 = vmatprep.subr.bf16.mxu0 0
    %356 = vmatpush1.bf16.msra.mxu0 0
    %357 = vmatprep.subr.bf16.mxu0 0
    %358 = vmatpush1.bf16.msra.mxu0 0
    %359 = vmatprep.subr.bf16.mxu0 0
    %360 = vmatpush1.bf16.msra.mxu0 0
    %361 = vmatprep.subr.bf16.mxu0 0
    %362 = vmatpush1.bf16.msra.mxu0 0
    %363 = vmatprep.subr.bf16.mxu0 0
    %364 = vmatpush1.bf16.msra.mxu0 0
    %365 = vmatprep.subr.bf16.mxu0 0
    %366 = vmatpush1.bf16.msra.mxu0 0
    %367 = vmatprep.subr.bf16.mxu0 0
    %368 = vmatpush1.bf16.msra.mxu0 0
    %369 = vmatprep.subr.bf16.mxu0 0
    %370 = vmatpush1.bf16.msra.mxu0 0
    %371 = vmatprep.subr.bf16.mxu0 0
    %372 = vmatpush1.bf16.msra.mxu0 0
    %373 = vmatprep.subr.bf16.mxu0 0
    %374 = vmatpush1.bf16.msra.mxu0 0
    %375 = vmatprep.subr.bf16.mxu0 0
    %376 = vmatpush1.bf16.msra.mxu0 0
    %377 = vmatprep.subr.bf16.mxu0 0
    %378 = vmatpush1.bf16.msra.mxu0 0
    %379 = vmatprep.subr.bf16.mxu0 0
    %380 = vmatpush1.bf16.msra.mxu0 0
    %381 = vmatprep.mubr.bf16.mxu0 0
    %382 = vmatmul.mubr.bf16.gmra.mrb[0].mxu0 %v347
    %v383 = vpop.f32.mrb[0].mxu0
    %v384 = vadd.f32 0.0, %v383
    %v385 = vpop.f32.mrb[0].mxu0
    %v386 = vpop.f32.mrb[0].mxu0
    %v387 = vpop.f32.mrb[0].mxu0
    %388 = vdwg.mxu0
    %v389 = vadd.f32 %v341, %v384
    %v390 = vxor.u32 %v389, 2147483648
    %v391 = vmul.f32 %v390, 1.442695
    %v392 = vpow.pop %v391
    %v393 = vadd.f32 %v392, 1.0
    %v394 = vrcp.pop %v393
    %v395 = vmul.f32 1.0, %v394
    %v396 = vtanh.pop %v389
    %v397 = vmul.f32 %v395, %v327
    %399 = vrot.lane.b32.xlu0 %v396, 64
    %v400 = vpop.permute.xlu0 %399
    %v402 = vmul.f32 %v395, %v400
    %404 = vrot.lane.b32.xlu0 %v402, 32
    %v405 = vpop.permute.xlu0 %404
    %v407 = vadd.f32 %v397, %v405
    %v408 = vtanh.pop %v407
    %410 = vrot.lane.b32.xlu0 %v408, 64
    %v411 = vpop.permute.xlu0 %410
    %v413 = vmul.f32 %v395, %v411
    %415 = vrot.lane.b32.xlu0 %v413, 32
    %v416 = vpop.permute.xlu0 %415
    %s418 = scalar_lea.vmem [#allocation12], 24
    %419 = vst.msk [vmem:[%s418] sm:$0xff] %vm102, %v416
    %s420 = scalar_lea.vmem [#allocation4], 32
    %v421 = vld [vmem:[%s420] sm:$0xff]
    %v422 = vpack.c.bf16 %v413, %v413
    %424 = vrot.lane.b32.xlu0 %v422, 32
    %v425 = vpop.permute.xlu0 %424
    %v427 = vsel %vm102, %v425, 0
    %429 = vmatprep.subr.bf16.mxu0 0
    %430 = vmatpush1.bf16.msra.mxu0 %v98
    %431 = vmatprep.subr.bf16.mxu0 0
    %432 = vmatpush1.bf16.msra.mxu0 %v99
    %433 = vmatprep.subr.bf16.mxu0 0
    %434 = vmatpush1.bf16.msra.mxu0 0
    %435 = vmatprep.subr.bf16.mxu0 0
    %436 = vmatpush1.bf16.msra.mxu0 0
    %437 = vmatprep.subr.bf16.mxu0 0
    %438 = vmatpush1.bf16.msra.mxu0 0
    %439 = vmatprep.subr.bf16.mxu0 0
    %440 = vmatpush1.bf16.msra.mxu0 0
    %441 = vmatprep.subr.bf16.mxu0 0
    %442 = vmatpush1.bf16.msra.mxu0 0
    %443 = vmatprep.subr.bf16.mxu0 0
    %444 = vmatpush1.bf16.msra.mxu0 0
    %445 = vmatprep.subr.bf16.mxu0 0
    %446 = vmatpush1.bf16.msra.mxu0 0
    %447 = vmatprep.subr.bf16.mxu0 0
    %448 = vmatpush1.bf16.msra.mxu0 0
    %449 = vmatprep.subr.bf16.mxu0 0
    %450 = vmatpush1.bf16.msra.mxu0 0
    %451 = vmatprep.subr.bf16.mxu0 0
    %452 = vmatpush1.bf16.msra.mxu0 0
    %453 = vmatprep.subr.bf16.mxu0 0
    %454 = vmatpush1.bf16.msra.mxu0 0
    %455 = vmatprep.subr.bf16.mxu0 0
    %456 = vmatpush1.bf16.msra.mxu0 0
    %457 = vmatprep.subr.bf16.mxu0 0
    %458 = vmatpush1.bf16.msra.mxu0 0
    %459 = vmatprep.subr.bf16.mxu0 0
    %460 = vmatpush1.bf16.msra.mxu0 0
    %461 = vmatprep.mubr.bf16.mxu0 0
    %462 = vmatmul.mubr.bf16.gmra.mrb[0].mxu0 %v427
    %v463 = vpop.f32.mrb[0].mxu0
    %v464 = vadd.f32 0.0, %v463
    %v465 = vpop.f32.mrb[0].mxu0
    %v466 = vpop.f32.mrb[0].mxu0
    %v467 = vpop.f32.mrb[0].mxu0
    %468 = vdwg.mxu0
    %v469 = vadd.f32 %v421, %v464
    %v470 = vxor.u32 %v469, 2147483648
    %v471 = vmul.f32 %v470, 1.442695
    %v472 = vpow.pop %v471
    %v473 = vadd.f32 %v472, 1.0
    %v474 = vrcp.pop %v473
    %v475 = vmul.f32 1.0, %v474
    %v476 = vtanh.pop %v469
    %v477 = vmul.f32 %v475, %v407
    %479 = vrot.lane.b32.xlu0 %v476, 64
    %v480 = vpop.permute.xlu0 %479
    %v482 = vmul.f32 %v475, %v480
    %484 = vrot.lane.b32.xlu0 %v482, 32
    %v485 = vpop.permute.xlu0 %484
    %v487 = vadd.f32 %v477, %v485
    %v488 = vtanh.pop %v487
    %490 = vrot.lane.b32.xlu0 %v488, 64
    %v491 = vpop.permute.xlu0 %490
    %v493 = vmul.f32 %v475, %v491
    %495 = vrot.lane.b32.xlu0 %v493, 32
    %v496 = vpop.permute.xlu0 %495
    %s498 = scalar_lea.vmem [#allocation12], 32
    %499 = vst.msk [vmem:[%s498] sm:$0xff] %vm102, %v496
    %s500 = scalar_lea.vmem [#allocation4], 40
    %v501 = vld [vmem:[%s500] sm:$0xff]
    %v502 = vpack.c.bf16 %v493, %v493
    %504 = vrot.lane.b32.xlu0 %v502, 32
    %v505 = vpop.permute.xlu0 %504
    %v507 = vsel %vm102, %v505, 0
    %509 = vmatprep.subr.bf16.mxu0 0
    %510 = vmatpush1.bf16.msra.mxu0 %v98
    %511 = vmatprep.subr.bf16.mxu0 0
    %512 = vmatpush1.bf16.msra.mxu0 %v99
    %513 = vmatprep.subr.bf16.mxu0 0
    %514 = vmatpush1.bf16.msra.mxu0 0
    %515 = vmatprep.subr.bf16.mxu0 0
    %516 = vmatpush1.bf16.msra.mxu0 0
    %517 = vmatprep.subr.bf16.mxu0 0
    %518 = vmatpush1.bf16.msra.mxu0 0
    %519 = vmatprep.subr.bf16.mxu0 0
    %520 = vmatpush1.bf16.msra.mxu0 0
    %521 = vmatprep.subr.bf16.mxu0 0
    %522 = vmatpush1.bf16.msra.mxu0 0
    %523 = vmatprep.subr.bf16.mxu0 0
    %524 = vmatpush1.bf16.msra.mxu0 0
    %525 = vmatprep.subr.bf16.mxu0 0
    %526 = vmatpush1.bf16.msra.mxu0 0
    %527 = vmatprep.subr.bf16.mxu0 0
    %528 = vmatpush1.bf16.msra.mxu0 0
    %529 = vmatprep.subr.bf16.mxu0 0
    %530 = vmatpush1.bf16.msra.mxu0 0
    %531 = vmatprep.subr.bf16.mxu0 0
    %532 = vmatpush1.bf16.msra.mxu0 0
    %533 = vmatprep.subr.bf16.mxu0 0
    %534 = vmatpush1.bf16.msra.mxu0 0
    %535 = vmatprep.subr.bf16.mxu0 0
    %536 = vmatpush1.bf16.msra.mxu0 0
    %537 = vmatprep.subr.bf16.mxu0 0
    %538 = vmatpush1.bf16.msra.mxu0 0
    %539 = vmatprep.subr.bf16.mxu0 0
    %540 = vmatpush1.bf16.msra.mxu0 0
    %541 = vmatprep.mubr.bf16.mxu0 0
    %542 = vmatmul.mubr.bf16.gmra.mrb[0].mxu0 %v507
    %v543 = vpop.f32.mrb[0].mxu0
    %v544 = vadd.f32 0.0, %v543
    %v545 = vpop.f32.mrb[0].mxu0
    %v546 = vpop.f32.mrb[0].mxu0
    %v547 = vpop.f32.mrb[0].mxu0
    %548 = vdwg.mxu0
    %v549 = vadd.f32 %v501, %v544
    %v550 = vxor.u32 %v549, 2147483648
    %v551 = vmul.f32 %v550, 1.442695
    %v552 = vpow.pop %v551
    %v553 = vadd.f32 %v552, 1.0
    %v554 = vrcp.pop %v553
    %v555 = vmul.f32 1.0, %v554
    %v556 = vtanh.pop %v549
    %v557 = vmul.f32 %v555, %v487
    %559 = vrot.lane.b32.xlu0 %v556, 64
    %v560 = vpop.permute.xlu0 %559
    %v562 = vmul.f32 %v555, %v560
    %564 = vrot.lane.b32.xlu0 %v562, 32
    %v565 = vpop.permute.xlu0 %564
    %v567 = vadd.f32 %v557, %v565
    %v568 = vtanh.pop %v567
    %570 = vrot.lane.b32.xlu0 %v568, 64
    %v571 = vpop.permute.xlu0 %570
    %v573 = vmul.f32 %v555, %v571
    %575 = vrot.lane.b32.xlu0 %v573, 32
    %v576 = vpop.permute.xlu0 %575
    %s578 = scalar_lea.vmem [#allocation12], 40
    %579 = vst.msk [vmem:[%s578] sm:$0xff] %vm102, %v576
    %s580 = scalar_lea.vmem [#allocation4], 48
    %v581 = vld [vmem:[%s580] sm:$0xff]
    %v582 = vpack.c.bf16 %v573, %v573
    %584 = vrot.lane.b32.xlu0 %v582, 32
    %v585 = vpop.permute.xlu0 %584
    %v587 = vsel %vm102, %v585, 0
    %589 = vmatprep.subr.bf16.mxu0 0
    %590 = vmatpush1.bf16.msra.mxu0 %v98
    %591 = vmatprep.subr.bf16.mxu0 0
    %592 = vmatpush1.bf16.msra.mxu0 %v99
    %593 = vmatprep.subr.bf16.mxu0 0
    %594 = vmatpush1.bf16.msra.mxu0 0
    %595 = vmatprep.subr.bf16.mxu0 0
    %596 = vmatpush1.bf16.msra.mxu0 0
    %597 = vmatprep.subr.bf16.mxu0 0
    %598 = vmatpush1.bf16.msra.mxu0 0
    %599 = vmatprep.subr.bf16.mxu0 0
    %600 = vmatpush1.bf16.msra.mxu0 0
    %601 = vmatprep.subr.bf16.mxu0 0
    %602 = vmatpush1.bf16.msra.mxu0 0
    %603 = vmatprep.subr.bf16.mxu0 0
    %604 = vmatpush1.bf16.msra.mxu0 0
    %605 = vmatprep.subr.bf16.mxu0 0
    %606 = vmatpush1.bf16.msra.mxu0 0
    %607 = vmatprep.subr.bf16.mxu0 0
    %608 = vmatpush1.bf16.msra.mxu0 0
    %609 = vmatprep.subr.bf16.mxu0 0
    %610 = vmatpush1.bf16.msra.mxu0 0
    %611 = vmatprep.subr.bf16.mxu0 0
    %612 = vmatpush1.bf16.msra.mxu0 0
    %613 = vmatprep.subr.bf16.mxu0 0
    %614 = vmatpush1.bf16.msra.mxu0 0
    %615 = vmatprep.subr.bf16.mxu0 0
    %616 = vmatpush1.bf16.msra.mxu0 0
    %617 = vmatprep.subr.bf16.mxu0 0
    %618 = vmatpush1.bf16.msra.mxu0 0
    %619 = vmatprep.subr.bf16.mxu0 0
    %620 = vmatpush1.bf16.msra.mxu0 0
    %621 = vmatprep.mubr.bf16.mxu0 0
    %622 = vmatmul.mubr.bf16.gmra.mrb[0].mxu0 %v587
    %v623 = vpop.f32.mrb[0].mxu0
    %v624 = vadd.f32 0.0, %v623
    %v625 = vpop.f32.mrb[0].mxu0
    %v626 = vpop.f32.mrb[0].mxu0
    %v627 = vpop.f32.mrb[0].mxu0
    %628 = vdwg.mxu0
    %v629 = vadd.f32 %v581, %v624
    %v630 = vxor.u32 %v629, 2147483648
    %v631 = vmul.f32 %v630, 1.442695
    %v632 = vpow.pop %v631
    %v633 = vadd.f32 %v632, 1.0
    %v634 = vrcp.pop %v633
    %v635 = vmul.f32 1.0, %v634
    %v636 = vtanh.pop %v629
    %v637 = vmul.f32 %v635, %v567
    %639 = vrot.lane.b32.xlu0 %v636, 64
    %v640 = vpop.permute.xlu0 %639
    %v642 = vmul.f32 %v635, %v640
    %644 = vrot.lane.b32.xlu0 %v642, 32
    %v645 = vpop.permute.xlu0 %644
    %v647 = vadd.f32 %v637, %v645
    %v648 = vtanh.pop %v647
    %650 = vrot.lane.b32.xlu0 %v648, 64
    %v651 = vpop.permute.xlu0 %650
    %v653 = vmul.f32 %v635, %v651
    %655 = vrot.lane.b32.xlu0 %v653, 32
    %v656 = vpop.permute.xlu0 %655
    %s658 = scalar_lea.vmem [#allocation12], 48
    %659 = vst.msk [vmem:[%s658] sm:$0xff] %vm102, %v656
    %s660 = scalar_lea.vmem [#allocation4], 56
    %v661 = vld [vmem:[%s660] sm:$0xff]
    %v662 = vpack.c.bf16 %v653, %v653
    %664 = vrot.lane.b32.xlu0 %v662, 32
    %v665 = vpop.permute.xlu0 %664
    %v667 = vsel %vm102, %v665, 0
    %669 = vmatprep.subr.bf16.mxu0 0
    %670 = vmatpush1.bf16.msra.mxu0 %v98
    %671 = vmatprep.subr.bf16.mxu0 0
    %672 = vmatpush1.bf16.msra.mxu0 %v99
    %673 = vmatprep.subr.bf16.mxu0 0
    %674 = vmatpush1.bf16.msra.mxu0 0
    %675 = vmatprep.subr.bf16.mxu0 0
    %676 = vmatpush1.bf16.msra.mxu0 0
    %677 = vmatprep.subr.bf16.mxu0 0
    %678 = vmatpush1.bf16.msra.mxu0 0
    %679 = vmatprep.subr.bf16.mxu0 0
    %680 = vmatpush1.bf16.msra.mxu0 0
    %681 = vmatprep.subr.bf16.mxu0 0
    %682 = vmatpush1.bf16.msra.mxu0 0
    %683 = vmatprep.subr.bf16.mxu0 0
    %684 = vmatpush1.bf16.msra.mxu0 0
    %685 = vmatprep.subr.bf16.mxu0 0
    %686 = vmatpush1.bf16.msra.mxu0 0
    %687 = vmatprep.subr.bf16.mxu0 0
    %688 = vmatpush1.bf16.msra.mxu0 0
    %689 = vmatprep.subr.bf16.mxu0 0
    %690 = vmatpush1.bf16.msra.mxu0 0
    %691 = vmatprep.subr.bf16.mxu0 0
    %692 = vmatpush1.bf16.msra.mxu0 0
    %693 = vmatprep.subr.bf16.mxu0 0
    %694 = vmatpush1.bf16.msra.mxu0 0
    %695 = vmatprep.subr.bf16.mxu0 0
    %696 = vmatpush1.bf16.msra.mxu0 0
    %697 = vmatprep.subr.bf16.mxu0 0
    %698 = vmatpush1.bf16.msra.mxu0 0
    %699 = vmatprep.subr.bf16.mxu0 0
    %700 = vmatpush1.bf16.msra.mxu0 0
    %701 = vmatprep.mubr.bf16.mxu0 0
    %702 = vmatmul.mubr.bf16.gmra.mrb[0].mxu0 %v667
    %v703 = vpop.f32.mrb[0].mxu0
    %v704 = vadd.f32 0.0, %v703
    %v705 = vpop.f32.mrb[0].mxu0
    %v706 = vpop.f32.mrb[0].mxu0
    %v707 = vpop.f32.mrb[0].mxu0
    %708 = vdwg.mxu0
    %v709 = vadd.f32 %v661, %v704
    %v710 = vxor.u32 %v709, 2147483648
    %v711 = vmul.f32 %v710, 1.442695
    %v712 = vpow.pop %v711
    %v713 = vadd.f32 %v712, 1.0
    %v714 = vrcp.pop %v713
    %v715 = vmul.f32 1.0, %v714
    %v716 = vtanh.pop %v709
    %v717 = vmul.f32 %v715, %v647
    %719 = vrot.lane.b32.xlu0 %v716, 64
    %v720 = vpop.permute.xlu0 %719
    %v722 = vmul.f32 %v715, %v720
    %724 = vrot.lane.b32.xlu0 %v722, 32
    %v725 = vpop.permute.xlu0 %724
    %v727 = vadd.f32 %v717, %v725
    %v728 = vtanh.pop %v727
    %730 = vrot.lane.b32.xlu0 %v728, 64
    %v731 = vpop.permute.xlu0 %730
    %v733 = vmul.f32 %v715, %v731
    %735 = vrot.lane.b32.xlu0 %v733, 32
    %v736 = vpop.permute.xlu0 %735
    %s738 = scalar_lea.vmem [#allocation12], 56
    %739 = vst.msk [vmem:[%s738] sm:$0xff] %vm102, %v736
    %740 = vst.msk [vmem:[#allocation2] sm:$0xff] %vm102, %v736
    %742 = vrot.lane.b32.xlu0 %v727, 96
    %v743 = vpop.permute.xlu0 %742
    %745 = vst.msk [vmem:[#allocation3] sm:$0xff] %vm102, %v743
    // Predicated region
    $region38: #{tpu_custom_call.1} parent=1 // pred_check
      %p746 = pneg %p73
    $region39: #{tpu_custom_call.1} parent=1 // pred_check_branch
      %748 = sbr.rel (%p746) target = $region41
    $region40: #{tpu_custom_call.1} parent=1 // pred_region
      %749 = vst.msk [vmem:[#allocation13] sm:$0xff] %vm102, %v743
    $region41: #{tpu_custom_call.1} parent=1 // pred_fallthru
      _
    // Predicated region
    $region42: #{tpu_custom_call.1} parent=1 // pred_check
      _
    $region43: #{tpu_custom_call.1} parent=1 // pred_check_branch
      %751 = sbr.rel (0) target = $region45
    $region44: #{tpu_custom_call.1} parent=1 // pred_region
      %s753 = ssub.s32 1024, 1024
      %754 = vsyncadd [#allocation6], %s753
      %s755 = sshll.u32 [#allocation12], 4
      %s756 = int_to_ptr.vmem [resolvable:$true] %s755
      %761 = dma.vmem_to_hbm [thread:$0]  %s756, 1024, %s4, [#allocation6], 128, 128, 8
    $region45: #{tpu_custom_call.1} parent=1 // pred_fallthru
      _
    // Predicated region
    $region46: #{tpu_custom_call.1} parent=1 // pred_check
      _
    $region47: #{tpu_custom_call.1} parent=1 // pred_check_branch
      %763 = sbr.rel (0) target = $region49
    $region48: #{tpu_custom_call.1} parent=1 // pred_region
      %s765 = ssub.s32 128, 128
      %766 = vsyncadd [#allocation14], %s765
      %s768 = sshll.u32 [#allocation13], 4
      %s769 = int_to_ptr.vmem [resolvable:$true] %s768
      %771 = dma.vmem_to_hbm [thread:$0]  %s769, 128, %s5, [#allocation14]
    $region49: #{tpu_custom_call.1} parent=1 // pred_fallthru
      _
    // Predicated region
    $region50: #{tpu_custom_call.1} parent=1 // pred_check
      _
    $region51: #{tpu_custom_call.1} parent=1 // pred_check_branch
      %773 = sbr.rel (0) target = $region53
    $region52: #{tpu_custom_call.1} parent=1 // pred_region
      %774 = dma.done [#allocation6], 1024
    $region53: #{tpu_custom_call.1} parent=1 // pred_fallthru
      _
    // Predicated region
    $region54: #{tpu_custom_call.1} parent=1 // pred_check
      _
    $region55: #{tpu_custom_call.1} parent=1 // pred_check_branch
      %776 = sbr.rel (0) target = $region57
    $region56: #{tpu_custom_call.1} parent=1 // pred_region
      %777 = dma.done [#allocation14], 128
    $region57: #{tpu_custom_call.1} parent=1 // pred_fallthru
      _
    %778 = vsyncpa [#allocation5], 1
    %779 = vsyncpa [#allocation8], 1
    %780 = vsyncpa [#allocation11], 1
    %781 = vsyncpa [#allocation6], 1
    %782 = vsyncpa [#allocation14], 1

</llo_original>
